<compile_context>
chip_gen: v7x
topology: tpu7x:2x2x1
jax: 0.10.0
libtpu: 0.0.40
codegen_flags: <defaults>
</compile_context>

<pallas_src>
import functools

import jax
import jax.numpy as jnp
from jax.experimental import pallas as pl
from jax.experimental.pallas import tpu as pltpu

_MIB = 1024 * 1024


def _cdiv(a, b):
    return (a + b - 1) // b


def _round_up(x, m):
    return _cdiv(x, m) * m


def _prep(a, rows, cols, dtype):
    """Cast + zero-pad a 2-D array to (rows, cols); no-op pad when aligned."""
    a = a.astype(dtype)
    if a.shape == (rows, cols):
        return a
    return jnp.pad(a, ((0, rows - a.shape[0]), (0, cols - a.shape[1])))


def _vmem_capacity_bytes():
    try:
        cap = getattr(pltpu.get_tpu_info(), "vmem_capacity_bytes", None)
        if cap:
            return int(cap)
    except Exception:
        pass
    return 64 * _MIB  # conservative fallback (v7x per-TensorCore VMEM)


def _vmem_need_bytes(TM, TF, E_pad, grid_f, feat_bytes):
    """Rough per-step VMEM footprint estimate for tile selection."""
    wbuf = 1 if grid_f == 1 else 2                      # resident vs streamed
    weights = 2 * (E_pad * TF * 2) * wbuf               # W_enc + W_dec (bf16)
    vecs = 2 * (TF * 4) * wbuf + E_pad * 4              # b_enc, dec_norm, b_dec
    x_blk = 2 * TM * E_pad * 4                          # <= f32, double-buffered
    recon_blk = 2 * TM * E_pad * 4
    feat_blk = 2 * TM * TF * feat_bytes
    loss_blk = 2 * TF * 4
    interim = 4 * TM * TF * 4 + TM * E_pad * 4          # in-kernel temporaries
    return weights + vecs + x_blk + recon_blk + feat_blk + loss_blk + interim


def _choose_tiles(M, E_pad, Fa_pad, budget_bytes, feat_bytes, tm=None, tf=None):
    tm_full = _round_up(max(M, 1), 16)                  # bf16 min sublane tile
    if tm is not None:
        tm_cands = [max(16, min(_round_up(tm, 16), tm_full))]
    else:
        tm_cands = [t for t in (512, 384, 256, 128, 64, 32, 16) if t <= tm_full]
        if tm_full < 512 and tm_full not in tm_cands:
            tm_cands.insert(0, tm_full)
        if not tm_cands:
            tm_cands = [tm_full]
    if tf is not None:
        tf_cands = [max(128, min(_round_up(tf, 128), Fa_pad))]
    else:
        tf_cands = [Fa_pad] + [t for t in (4096, 2048, 1024, 512, 256, 128)
                               if t < Fa_pad]

    for TF in tf_cands:
        gf = _cdiv(Fa_pad, TF)
        fitting = [t for t in tm_cands
                   if _vmem_need_bytes(t, TF, E_pad, gf, feat_bytes) <= budget_bytes]
        if not fitting:
            continue
        TM = fitting[0]                                  # largest fitting tile
        gm = _cdiv(M, TM)
        if gm > 1 and gm % 2 == 1:                       # v7x: even M-step count
            for t in fitting[1:]:
                gm2 = _cdiv(M, t)
                if gm2 % 2 == 0 and gm2 <= 2 * gm:
                    TM = t
                    break
        return TM, TF
    return tm_cands[-1], tf_cands[-1]


# ------------------------------ Pallas kernel ------------------------------
def _sae_kernel(x_ref, w_enc_ref, b_enc_ref, w_dec_ref, b_dec_ref, dec_norm_ref,
                recon_ref, feat_ref, loss_ref, *, tm, m_real,
                needs_row_mask, single_f):
    # x_ref:        (TM, E_pad)    f32/bf16   streamed over i, resident over f
    # w_enc_ref:    (E_pad, TF)    bf16       resident (grid_f==1) or streamed
    # b_enc_ref:    (1, TF)        f32
    # w_dec_ref:    (TF, E_pad)    bf16
    # b_dec_ref:    (1, E_pad)     f32        resident
    # dec_norm_ref: (1, TF)        f32        precomputed ||W_dec_row||_2
    # recon_ref:    (TM, E_pad)    f32        accumulated across the f axis
    # feat_ref:     (TM, TF)       f32/bf16
    # loss_ref:     (1, 1, TF)     f32        per-(i,f) lane-wise row-sum
    x = x_ref[...].astype(w_enc_ref.dtype)

    # encode: relu(x @ W_enc + b_enc)  (bf16 MXU operands, f32 accumulation)
    pre = jnp.dot(x, w_enc_ref[...], preferred_element_type=jnp.float32)
    feat = jnp.maximum(pre + b_enc_ref[...], 0.0)                  # (TM, TF) f32
    feat_ref[...] = feat.astype(feat_ref.dtype)

    # decode: recon accumulated in the revisited output block across f.
    part = jnp.dot(feat.astype(w_dec_ref.dtype), w_dec_ref[...],
                   preferred_element_type=jnp.float32)
    if single_f:
        recon_ref[...] = part + b_dec_ref[...]
    else:
        @pl.when(pl.program_id(1) == 0)
        def _():
            recon_ref[...] = jnp.broadcast_to(b_dec_ref[...], recon_ref.shape)

        recon_ref[...] += part

    # sparsity partial: row-sum of feat * ||W_dec_row||.  Full tiles carry no
    # mask; only the tail M tile (padded rows) redoes the sum masked.
    w = feat * dec_norm_ref[...]
    loss_ref[...] = jnp.sum(w, axis=0, keepdims=True).reshape(1, 1, -1)
    if needs_row_mask:
        @pl.when(pl.program_id(0) == pl.num_programs(0) - 1)
        def _():
            rows = (pl.program_id(0) * tm
                    + jax.lax.broadcasted_iota(jnp.int32, (tm, 1), 0))
            mask = (rows < m_real).astype(jnp.float32)
            loss_ref[...] = jnp.sum(w * mask, axis=0,
                                    keepdims=True).reshape(1, 1, -1)


# --------------------------------- wrapper ----------------------------------
def sae_forward_pallas(x, w_enc, b_enc, w_dec, b_dec, l1_coefficients,
                       layer_idx, feature_size, *, tm=None, tf=None,
                       feat_dtype=jnp.float32, mxu_dtype=jnp.bfloat16):
    """Fused MultiLayerSAE forward.

    Returns (x_reconstructed (B,T,E), feature_magnitudes (B,T,Fa),
    sparsity_loss scalar).  layer_idx / feature_size are static Python ints.
    Set feat_dtype=jnp.bfloat16 to halve feature-magnitude HBM traffic if the
    consumer tolerates it.
    """
    B, T, E = x.shape
    M = B * T
    Fa = (layer_idx + 1) * feature_size

    # lane padding (choose E / feature_size as multiples of 128 to make these
    # no-ops; 256-alignment only matters once MXU-bound on v6e/v7x).
    E_pad = _round_up(E, 128)
    Fa_pad = _round_up(Fa, 128)

    # ---- generation-aware VMEM budget & tile selection ----
    cap = _vmem_capacity_bytes()
    vmem_limit = max(min(cap - 16 * _MIB, 100 * _MIB), 32 * _MIB)
    budget = int(vmem_limit * 0.8)
    feat_bytes = jnp.dtype(feat_dtype).itemsize
    TM, TF = _choose_tiles(M, E_pad, Fa_pad, budget, feat_bytes, tm=tm, tf=tf)
    Fa_pad = _round_up(Fa_pad, TF)
    grid_f = Fa_pad // TF
    M_pad = _round_up(M, TM)
    grid_m = M_pad // TM
    weights_resident = (grid_f == 1)
    needs_row_mask = (M_pad != M)

    # ---- operand prep: only pad/cast when actually required ----
    x2 = x.reshape(M, E)
    if (M_pad, E_pad) == (M, E):
        x_in = x2                                     # cast to bf16 in-kernel
    else:
        x_in = _prep(x2, M_pad, E_pad, mxu_dtype)
    w_enc_in = _prep(w_enc[:, :Fa], E_pad, Fa_pad, mxu_dtype)
    w_dec_s = w_dec[:Fa, :]
    w_dec_in = _prep(w_dec_s, Fa_pad, E_pad, mxu_dtype)
    b_enc_in = _prep(b_enc[:Fa].reshape(1, Fa), 1, Fa_pad, jnp.float32)
    b_dec_in = _prep(b_dec.reshape(1, E), 1, E_pad, jnp.float32)
    dec_norm = jnp.sqrt(jnp.sum(w_dec_s.astype(jnp.float32) ** 2, axis=1))
    dec_norm_in = _prep(dec_norm.reshape(1, Fa), 1, Fa_pad, jnp.float32)

    kernel = functools.partial(_sae_kernel, tm=TM, m_real=M,
                               needs_row_mask=needs_row_mask,
                               single_f=(grid_f == 1))

    def _resident_spec(shape, imap, resident):
        if resident:
            return pl.BlockSpec(shape, imap, pipeline_mode=pl.Buffered(1))
        return pl.BlockSpec(shape, imap)

    in_specs = [
        pl.BlockSpec((TM, E_pad), lambda i, f: (i, 0)),                      # x
        _resident_spec((E_pad, TF), lambda i, f: (0, f), weights_resident),  # W_enc
        _resident_spec((1, TF), lambda i, f: (0, f), weights_resident),      # b_enc
        _resident_spec((TF, E_pad), lambda i, f: (f, 0), weights_resident),  # W_dec
        _resident_spec((1, E_pad), lambda i, f: (0, 0), True),               # b_dec
        _resident_spec((1, TF), lambda i, f: (0, f), weights_resident),      # dec_norm
    ]
    out_specs = (
        pl.BlockSpec((TM, E_pad), lambda i, f: (i, 0)),        # recon (acc over f)
        pl.BlockSpec((TM, TF), lambda i, f: (i, f)),           # feat
        pl.BlockSpec((1, 1, TF), lambda i, f: (i, 0, f)),      # loss partials
    )

    flops = 4 * M_pad * E_pad * Fa_pad                        # two matmuls
    w_bytes = (w_enc_in.size + w_dec_in.size) * w_enc_in.dtype.itemsize
    bytes_accessed = (
        x_in.size * x_in.dtype.itemsize
        + w_bytes * (1 if weights_resident else grid_m)
        + (b_enc_in.size + b_dec_in.size + dec_norm_in.size) * 4
        + M_pad * E_pad * 4 + M_pad * Fa_pad * feat_bytes + grid_m * Fa_pad * 4)

    recon_p, feat_p, loss_part = pl.pallas_call(
        kernel,
        out_shape=(
            jax.ShapeDtypeStruct((M_pad, E_pad), jnp.float32),
            jax.ShapeDtypeStruct((M_pad, Fa_pad), feat_dtype),
            jax.ShapeDtypeStruct((grid_m, 1, Fa_pad), jnp.float32),
        ),
        grid=(grid_m, grid_f),
        in_specs=in_specs,
        out_specs=out_specs,
        compiler_params=pltpu.CompilerParams(
            dimension_semantics=("parallel", "arbitrary"),
            vmem_limit_bytes=int(vmem_limit),
        ),
        cost_estimate=pl.CostEstimate(
            flops=flops, transcendentals=0, bytes_accessed=int(bytes_accessed)),
    )(x_in, w_enc_in, b_enc_in, w_dec_in, b_dec_in, dec_norm_in)

    # finalize sparsity loss: divide by GLOBAL token count, scale by layer l1.
    l1 = l1_coefficients[layer_idx].astype(jnp.float32)
    sparsity = (jnp.sum(loss_part) / M) * l1

    recon2 = recon_p[:M] if E_pad == E else recon_p[:M, :E]
    feat2 = feat_p[:M] if Fa_pad == Fa else feat_p[:M, :Fa]
    recon = recon2.reshape(B, T, E)
    feat = feat2.reshape(B, T, Fa)
    return recon, feat, sparsity


# ----------------------------- pure-JAX reference ----------------------------
def sae_forward_ref(x, w_enc, b_enc, w_dec, b_dec, l1_coefficients,
                    layer_idx, feature_size):
    end_idx = (layer_idx + 1) * feature_size
    feat = jax.nn.relu(x @ w_enc[:, :end_idx] + b_enc[:end_idx])
    recon = feat @ w_dec[:end_idx, :] + b_dec
    dec_norm = jnp.linalg.norm(w_dec[:end_idx, :], axis=1)
    weighted = feat * dec_norm
    sparsity = weighted.sum(-1).mean() * l1_coefficients[layer_idx]
    return recon, feat, sparsity


# ----------------------------------- main ------------------------------------
if __name__ == "__main__":
    # small config: gpt n_layer=3 -> n_layers=4, feature_size=16, n_embd=32
    gpt_n_layer = 3
    n_layers = gpt_n_layer + 1
    feature_size = 16
    embed = 32
    hidden = feature_size * n_layers          # 64
    B, T = 2, 8
    layer_idx = 2                             # active features Fa = 48

    key = jax.random.PRNGKey(0)
    kx, kw = jax.random.split(key)

    # kaiming_uniform_ on (H, E): fan_in = E, bound = sqrt(6 / fan_in);
    # W_enc = W_dec.T; biases zero.
    bound = (6.0 / embed) ** 0.5
    w_dec = jax.random.uniform(kw, (hidden, embed), jnp.float32, -bound, bound)
    w_enc = w_dec.T
    b_enc = jnp.zeros((hidden,), jnp.float32)
    b_dec = jnp.zeros((embed,), jnp.float32)
    l1_coefficients = jnp.full((n_layers,), 0.01, jnp.float32)

    x = jax.random.normal(kx, (B, T, embed), jnp.float32)

    fwd = jax.jit(functools.partial(sae_forward_pallas,
                                    layer_idx=layer_idx,
                                    feature_size=feature_size))
    recon, feat, loss = fwd(x, w_enc, b_enc, w_dec, b_dec, l1_coefficients)
    jax.block_until_ready((recon, feat, loss))

    # correctness check vs pure-f32 reference (kernel uses bf16 MXU operands
    # with f32 accumulation -> loosened tolerance).
    r_ref, f_ref, l_ref = sae_forward_ref(x, w_enc, b_enc, w_dec, b_dec,
                                          l1_coefficients, layer_idx,
                                          feature_size)
    assert recon.shape == r_ref.shape and feat.shape == f_ref.shape
    assert jnp.allclose(recon, r_ref, atol=5e-2, rtol=5e-2)
    assert jnp.allclose(feat, f_ref, atol=5e-2, rtol=5e-2)
    assert jnp.allclose(loss, l_ref, atol=5e-2, rtol=5e-2)

    print("KERNEL_OK")
</pallas_src>

<mosaic_0001>
module attributes {stable_mosaic.version = 11 : i64} {
  func.func @_sae_kernel(%arg0: i32, %arg1: i32, %arg2: memref<16x128xbf16, #tpu.memory_space<vmem>>, %arg3: memref<128x128xbf16, #tpu.memory_space<vmem>>, %arg4: memref<1x128xf32, #tpu.memory_space<vmem>>, %arg5: memref<128x128xbf16, #tpu.memory_space<vmem>>, %arg6: memref<1x128xf32, #tpu.memory_space<vmem>>, %arg7: memref<1x128xf32, #tpu.memory_space<vmem>>, %arg8: memref<16x128xf32, #tpu.memory_space<vmem>>, %arg9: memref<16x128xf32, #tpu.memory_space<vmem>>, %arg10: memref<1x1x128xf32, #tpu.memory_space<vmem>>) attributes {dimension_semantics = [#tpu.dimension_semantics<parallel>, #tpu.dimension_semantics<arbitrary>], iteration_bounds = array<i64: 1, 1>, scalar_prefetch = 0 : i64, scratch_operands = 0 : i64, tpu.core_type = #tpu.core_type<tc>, window_params = [{transform_indices = @transform_0, window_bounds = array<i64: 16, 128>}, {pipeline_mode = #tpu.pipeline_mode<synchronous>, transform_indices = @transform_1, window_bounds = array<i64: 128, 128>}, {pipeline_mode = #tpu.pipeline_mode<synchronous>, transform_indices = @transform_2, window_bounds = array<i64: 1, 128>}, {pipeline_mode = #tpu.pipeline_mode<synchronous>, transform_indices = @transform_3, window_bounds = array<i64: 128, 128>}, {pipeline_mode = #tpu.pipeline_mode<synchronous>, transform_indices = @transform_4, window_bounds = array<i64: 1, 128>}, {pipeline_mode = #tpu.pipeline_mode<synchronous>, transform_indices = @transform_5, window_bounds = array<i64: 1, 128>}, {transform_indices = @transform_6, window_bounds = array<i64: 16, 128>}, {transform_indices = @transform_7, window_bounds = array<i64: 16, 128>}, {transform_indices = @transform_8, window_bounds = array<i64: 1, 1, 128>}]} {
    %c0 = arith.constant 0 : index
    %c0_0 = arith.constant 0 : index
    %0 = vector.load %arg2[%c0, %c0_0] : memref<16x128xbf16, #tpu.memory_space<vmem>>, vector<16x128xbf16>
    %c0_1 = arith.constant 0 : index
    %c0_2 = arith.constant 0 : index
    %1 = vector.load %arg3[%c0_1, %c0_2] : memref<128x128xbf16, #tpu.memory_space<vmem>>, vector<128x128xbf16>
    %cst = arith.constant dense<0.000000e+00> : vector<16x128xf32>
    %2 = tpu.matmul %0, %1, %cst {dimension_numbers = #tpu.dot_dimension_numbers<[1], [0], [0], [1], [0, 0, 1, 1], [], []>} : vector<16x128xbf16>, vector<128x128xbf16>, vector<16x128xf32> -> vector<16x128xf32>
    %c0_3 = arith.constant 0 : index
    %c0_4 = arith.constant 0 : index
    %3 = vector.load %arg4[%c0_3, %c0_4] : memref<1x128xf32, #tpu.memory_space<vmem>>, vector<1x128xf32>
    %4 = vector.broadcast %3 : vector<1x128xf32> to vector<16x128xf32>
    %5 = arith.addf %2, %4 : vector<16x128xf32>
    %cst_5 = arith.constant 0.000000e+00 : f32
    %6 = vector.broadcast %cst_5 : f32 to vector<16x128xf32>
    %7 = arith.maximumf %5, %6 : vector<16x128xf32>
    %c0_6 = arith.constant 0 : index
    %c0_7 = arith.constant 0 : index
    %8 = vector.load %arg9[%c0_6, %c0_7] : memref<16x128xf32, #tpu.memory_space<vmem>>, vector<16x128xf32>
    tpu.vector_store %arg9[%c0_6, %c0_7], %7 {strides = array<i32>} : memref<16x128xf32, #tpu.memory_space<vmem>>, vector<16x128xf32>,
    %9 = arith.truncf %7 : vector<16x128xf32> to vector<16x128xbf16>
    %c0_8 = arith.constant 0 : index
    %c0_9 = arith.constant 0 : index
    %10 = vector.load %arg5[%c0_8, %c0_9] : memref<128x128xbf16, #tpu.memory_space<vmem>>, vector<128x128xbf16>
    %cst_10 = arith.constant dense<0.000000e+00> : vector<16x128xf32>
    %11 = tpu.matmul %9, %10, %cst_10 {dimension_numbers = #tpu.dot_dimension_numbers<[1], [0], [0], [1], [0, 0, 1, 1], [], []>} : vector<16x128xbf16>, vector<128x128xbf16>, vector<16x128xf32> -> vector<16x128xf32>
    %c0_11 = arith.constant 0 : index
    %c0_12 = arith.constant 0 : index
    %12 = vector.load %arg6[%c0_11, %c0_12] : memref<1x128xf32, #tpu.memory_space<vmem>>, vector<1x128xf32>
    %13 = vector.broadcast %12 : vector<1x128xf32> to vector<16x128xf32>
    %14 = arith.addf %11, %13 : vector<16x128xf32>
    %c0_13 = arith.constant 0 : index
    %c0_14 = arith.constant 0 : index
    %15 = vector.load %arg8[%c0_13, %c0_14] : memref<16x128xf32, #tpu.memory_space<vmem>>, vector<16x128xf32>
    tpu.vector_store %arg8[%c0_13, %c0_14], %14 {strides = array<i32>} : memref<16x128xf32, #tpu.memory_space<vmem>>, vector<16x128xf32>,
    %c0_15 = arith.constant 0 : index
    %c0_16 = arith.constant 0 : index
    %16 = vector.load %arg7[%c0_15, %c0_16] : memref<1x128xf32, #tpu.memory_space<vmem>>, vector<1x128xf32>
    %17 = vector.broadcast %16 : vector<1x128xf32> to vector<16x128xf32>
    %18 = arith.mulf %7, %17 : vector<16x128xf32>
    %cst_17 = arith.constant dense<0.000000e+00> : vector<128xf32>
    %19 = vector.multi_reduction <add>, %18, %cst_17 [0] : vector<16x128xf32> to vector<128xf32>
    %20 = vector.shape_cast %19 : vector<128xf32> to vector<1x128xf32>
    %21 = vector.shape_cast %20 : vector<1x128xf32> to vector<1x1x128xf32>
    %c0_18 = arith.constant 0 : index
    %c0_19 = arith.constant 0 : index
    %c0_20 = arith.constant 0 : index
    %22 = vector.load %arg10[%c0_18, %c0_19, %c0_20] : memref<1x1x128xf32, #tpu.memory_space<vmem>>, vector<1x1x128xf32>
    tpu.vector_store %arg10[%c0_18, %c0_19, %c0_20], %21 {strides = array<i32>} : memref<1x1x128xf32, #tpu.memory_space<vmem>>, vector<1x1x128xf32>,
    return
  }
  func.func @transform_0(%arg0: i32, %arg1: i32) -> (i32, i32) {
    %c0_i32 = arith.constant 0 : i32
    %c0_i32_0 = arith.constant 0 : i32
    return %arg0, %c0_i32 : i32, i32
  }
  func.func @transform_1(%arg0: i32, %arg1: i32) -> (i32, i32) {
    %c0_i32 = arith.constant 0 : i32
    %c0_i32_0 = arith.constant 0 : i32
    return %c0_i32, %arg1 : i32, i32
  }
  func.func @transform_2(%arg0: i32, %arg1: i32) -> (i32, i32) {
    %c0_i32 = arith.constant 0 : i32
    %c0_i32_0 = arith.constant 0 : i32
    return %c0_i32, %arg1 : i32, i32
  }
  func.func @transform_3(%arg0: i32, %arg1: i32) -> (i32, i32) {
    %c0_i32 = arith.constant 0 : i32
    %c0_i32_0 = arith.constant 0 : i32
    return %arg1, %c0_i32 : i32, i32
  }
  func.func @transform_4(%arg0: i32, %arg1: i32) -> (i32, i32) {
    %c0_i32 = arith.constant 0 : i32
    %c0_i32_0 = arith.constant 0 : i32
    %c0_i32_1 = arith.constant 0 : i32
    return %c0_i32, %c0_i32_0 : i32, i32
  }
  func.func @transform_5(%arg0: i32, %arg1: i32) -> (i32, i32) {
    %c0_i32 = arith.constant 0 : i32
    %c0_i32_0 = arith.constant 0 : i32
    return %c0_i32, %arg1 : i32, i32
  }
  func.func @transform_6(%arg0: i32, %arg1: i32) -> (i32, i32) {
    %c0_i32 = arith.constant 0 : i32
    %c0_i32_0 = arith.constant 0 : i32
    return %arg0, %c0_i32 : i32, i32
  }
  func.func @transform_7(%arg0: i32, %arg1: i32) -> (i32, i32) {
    %c0_i32 = arith.constant 0 : i32
    return %arg0, %arg1 : i32, i32
  }
  func.func @transform_8(%arg0: i32, %arg1: i32) -> (i32, i32, i32) {
    %c0_i32 = arith.constant 0 : i32
    %c0_i32_0 = arith.constant 0 : i32
    return %arg0, %c0_i32, %arg1 : i32, i32, i32
  }
}

</mosaic_0001>

<llo_original>
// kernel: sae_forward_pallas.1
$region0: #{sae_forward_pallas.1}
  #allocation0 [shape = 'u32[]', space=smem, size = 0x4, offset = 0x4, fixed_abs, tag = 'smem constant byte address 0x4 - core index']
  #allocation1 [shape = 'u32[144,128]{1,0:T(1,128)}', space=vmem, size = 0x12000, scoped, tag = 'internal scratch']
  %s0 = inlined_call_operand.vmem [shape: bf16[16,128], index: 0, kind: input, shape index: {}]
  %s1 = inlined_call_operand.vmem [shape: bf16[128,128], index: 1, kind: input, shape index: {}]
  %s2 = inlined_call_operand.vmem [shape: f32[1,128], index: 2, kind: input, shape index: {}]
  %s3 = inlined_call_operand.vmem [shape: bf16[128,128], index: 3, kind: input, shape index: {}]
  %s4 = inlined_call_operand.vmem [shape: f32[1,128], index: 4, kind: input, shape index: {}]
  %s5 = inlined_call_operand.vmem [shape: f32[1,128], index: 5, kind: input, shape index: {}]
  %s6 = inlined_call_operand.vmem [shape: f32[16,128], index: 6, kind: output, shape index: {0}]
  %s7 = inlined_call_operand.vmem [shape: f32[16,128], index: 7, kind: output, shape index: {1}]
  %s8 = inlined_call_operand.vmem [shape: f32[1,1,128], index: 8, kind: output, shape index: {2}]
  %9 = xla_tuple %s6, %s7, %s8
  %s10 = sld [smem:[#allocation0]]
  $region50: #{sae_forward_pallas.1} parent=0
    _
  %s12 = ssub.s32 1, %s10
  %s13 = scalar_select 0, %s12, %s10
  // Predicated region
  $region2: #{sae_forward_pallas.1} parent=0 // pred_check
    _
  $region3: #{sae_forward_pallas.1} parent=0 // pred_check_branch
    %15 = sbr.rel (0) target = $region5
  $region4: #{sae_forward_pallas.1} parent=0 // pred_region
    _
  $region5: #{sae_forward_pallas.1} parent=0 // pred_fallthru
    _
  // Predicated region
  $region6: #{sae_forward_pallas.1} parent=0 // pred_check
    _
  $region7: #{sae_forward_pallas.1} parent=0 // pred_check_branch
    %17 = sbr.rel (0) target = $region9
  $region8: #{sae_forward_pallas.1} parent=0 // pred_region
    _
  $region9: #{sae_forward_pallas.1} parent=0 // pred_fallthru
    _
  // Predicated region
  $region10: #{sae_forward_pallas.1} parent=0 // pred_check
    _
  $region11: #{sae_forward_pallas.1} parent=0 // pred_check_branch
    %19 = sbr.rel (0) target = $region13
  $region12: #{sae_forward_pallas.1} parent=0 // pred_region
    _
  $region13: #{sae_forward_pallas.1} parent=0 // pred_fallthru
    _
  // Predicated region
  $region14: #{sae_forward_pallas.1} parent=0 // pred_check
    _
  $region15: #{sae_forward_pallas.1} parent=0 // pred_check_branch
    %21 = sbr.rel (0) target = $region17
  $region16: #{sae_forward_pallas.1} parent=0 // pred_region
    _
  $region17: #{sae_forward_pallas.1} parent=0 // pred_fallthru
    _
  // Predicated region
  $region18: #{sae_forward_pallas.1} parent=0 // pred_check
    _
  $region19: #{sae_forward_pallas.1} parent=0 // pred_check_branch
    %23 = sbr.rel (0) target = $region21
  $region20: #{sae_forward_pallas.1} parent=0 // pred_region
    _
  $region21: #{sae_forward_pallas.1} parent=0 // pred_fallthru
    _
  // Predicated region
  $region22: #{sae_forward_pallas.1} parent=0 // pred_check
    _
  $region23: #{sae_forward_pallas.1} parent=0 // pred_check_branch
    %25 = sbr.rel (0) target = $region25
  $region24: #{sae_forward_pallas.1} parent=0 // pred_region
    _
  $region25: #{sae_forward_pallas.1} parent=0 // pred_fallthru
    _
  %v27 = vld [vmem:[%s0] sm:$0xf]
  %v28 = vld [vmem:[%s0 + $0x4] sm:$0xf]
  %v29 = vld [vmem:[%s1] sm:$0xf]
  %v30 = vld [vmem:[%s1 + $0x4] sm:$0xf]
  %v31 = vld [vmem:[%s1 + $0x8] sm:$0xf]
  %v32 = vld [vmem:[%s1 + $0xc] sm:$0xf]
  %v33 = vld [vmem:[%s1 + $0x10] sm:$0xf]
  %v34 = vld [vmem:[%s1 + $0x14] sm:$0xf]
  %v35 = vld [vmem:[%s1 + $0x18] sm:$0xf]
  %v36 = vld [vmem:[%s1 + $0x1c] sm:$0xf]
  %v37 = vld [vmem:[%s1 + $0x20] sm:$0xf]
  %v38 = vld [vmem:[%s1 + $0x24] sm:$0xf]
  %v39 = vld [vmem:[%s1 + $0x28] sm:$0xf]
  %v40 = vld [vmem:[%s1 + $0x2c] sm:$0xf]
  %v41 = vld [vmem:[%s1 + $0x30] sm:$0xf]
  %v42 = vld [vmem:[%s1 + $0x34] sm:$0xf]
  %v43 = vld [vmem:[%s1 + $0x38] sm:$0xf]
  %v44 = vld [vmem:[%s1 + $0x3c] sm:$0xf]
  %v45 = vld [vmem:[%s2] sm:$0x1]
  %v47 = vlaneseq
  %v48 = vshrl.u32 %v47, 7
  %v49 = vsub.s32 0, %v48
  %v50 = vrot.slane %v45, %v49
  %v54 = vunpack.c.l.b16 %v27
  %v55 = vunpack.c.l.b16 %v28
  %v56 = vpack.c.b16 %v55, %v54
  %v74 = vunpack.c.l.b16 %v29
  %v75 = vunpack.c.l.b16 %v30
  %v76 = vunpack.c.l.b16 %v31
  %v77 = vunpack.c.l.b16 %v32
  %v78 = vunpack.c.l.b16 %v33
  %v79 = vunpack.c.l.b16 %v34
  %v80 = vunpack.c.l.b16 %v35
  %v81 = vunpack.c.l.b16 %v36
  %v82 = vunpack.c.l.b16 %v37
  %v83 = vunpack.c.l.b16 %v38
  %v84 = vunpack.c.l.b16 %v39
  %v85 = vunpack.c.l.b16 %v40
  %v86 = vunpack.c.l.b16 %v41
  %v87 = vunpack.c.l.b16 %v42
  %v88 = vunpack.c.l.b16 %v43
  %v89 = vunpack.c.l.b16 %v44
  %v90 = vpack.c.b16 %v75, %v74
  %v91 = vpack.c.b16 %v77, %v76
  %v92 = vpack.c.b16 %v79, %v78
  %v93 = vpack.c.b16 %v81, %v80
  %v94 = vpack.c.b16 %v83, %v82
  %v95 = vpack.c.b16 %v85, %v84
  %v96 = vpack.c.b16 %v87, %v86
  %v97 = vpack.c.b16 %v89, %v88
  %106 = vmatprep.subr.bf16.mxu0 0
  %107 = vmatpush1.bf16.msra.mxu0 %v90
  %108 = vmatprep.subr.bf16.mxu0 0
  %109 = vmatpush1.bf16.msra.mxu0 %v91
  %110 = vmatprep.subr.bf16.mxu0 0
  %111 = vmatpush1.bf16.msra.mxu0 %v92
  %112 = vmatprep.subr.bf16.mxu0 0
  %113 = vmatpush1.bf16.msra.mxu0 %v93
  %114 = vmatprep.subr.bf16.mxu0 0
  %115 = vmatpush1.bf16.msra.mxu0 %v94
  %116 = vmatprep.subr.bf16.mxu0 0
  %117 = vmatpush1.bf16.msra.mxu0 %v95
  %118 = vmatprep.subr.bf16.mxu0 0
  %119 = vmatpush1.bf16.msra.mxu0 %v96
  %120 = vmatprep.subr.bf16.mxu0 0
  %121 = vmatpush1.bf16.msra.mxu0 %v97
  %122 = vmatprep.subr.bf16.mxu0 0
  %123 = vmatpush1.bf16.msra.mxu0 0
  %124 = vmatprep.subr.bf16.mxu0 0
  %125 = vmatpush1.bf16.msra.mxu0 0
  %126 = vmatprep.subr.bf16.mxu0 0
  %127 = vmatpush1.bf16.msra.mxu0 0
  %128 = vmatprep.subr.bf16.mxu0 0
  %129 = vmatpush1.bf16.msra.mxu0 0
  %130 = vmatprep.subr.bf16.mxu0 0
  %131 = vmatpush1.bf16.msra.mxu0 0
  %132 = vmatprep.subr.bf16.mxu0 0
  %133 = vmatpush1.bf16.msra.mxu0 0
  %134 = vmatprep.subr.bf16.mxu0 0
  %135 = vmatpush1.bf16.msra.mxu0 0
  %136 = vmatprep.subr.bf16.mxu0 0
  %137 = vmatpush1.bf16.msra.mxu0 0
  %138 = vmatprep.mubr.bf16.mxu0 0
  %139 = vmatmul.mubr.bf16.gmra.mrb[0].mxu0 %v56
  %v140 = vpop.f32.mrb[0].mxu0
  %v141 = vadd.f32 %v50, %v140
  %v142 = vpop.f32.mrb[0].mxu0
  %v143 = vpop.f32.mrb[0].mxu0
  %v144 = vadd.f32 %v50, %v143
  %v145 = vpop.f32.mrb[0].mxu0
  %146 = vdwg.mxu0
  %v147 = vmax.f32 %v141, 0.0
  %v148 = vmax.f32 %v144, 0.0
  %149 = vst [vmem:[%s7] sm:$0xff] %v147
  %150 = vst [vmem:[%s7 + $0x8] sm:$0xff] %v148
  %v151 = vpack.c.bf16 %v148, %v147
  %v152 = vld [vmem:[%s3] sm:$0xf]
  %v153 = vld [vmem:[%s3 + $0x4] sm:$0xf]
  %v154 = vld [vmem:[%s3 + $0x8] sm:$0xf]
  %v155 = vld [vmem:[%s3 + $0xc] sm:$0xf]
  %v156 = vld [vmem:[%s3 + $0x10] sm:$0xf]
  %v157 = vld [vmem:[%s3 + $0x14] sm:$0xf]
  %v158 = vld [vmem:[%s3 + $0x18] sm:$0xf]
  %v159 = vld [vmem:[%s3 + $0x1c] sm:$0xf]
  %v160 = vld [vmem:[%s3 + $0x20] sm:$0xf]
  %v161 = vld [vmem:[%s3 + $0x24] sm:$0xf]
  %v162 = vld [vmem:[%s3 + $0x28] sm:$0xf]
  %v163 = vld [vmem:[%s3 + $0x2c] sm:$0xf]
  %v164 = vld [vmem:[%s3 + $0x30] sm:$0xf]
  %v165 = vld [vmem:[%s3 + $0x34] sm:$0xf]
  %v166 = vld [vmem:[%s3 + $0x38] sm:$0xf]
  %v167 = vld [vmem:[%s3 + $0x3c] sm:$0xf]
  %v168 = vld [vmem:[%s4] sm:$0x1]
  %v170 = vlaneseq
  %v171 = vshrl.u32 %v170, 7
  %v172 = vsub.s32 0, %v171
  %v173 = vrot.slane %v168, %v172
  %v191 = vunpack.c.l.b16 %v152
  %v192 = vunpack.c.l.b16 %v153
  %v193 = vunpack.c.l.b16 %v154
  %v194 = vunpack.c.l.b16 %v155
  %v195 = vunpack.c.l.b16 %v156
  %v196 = vunpack.c.l.b16 %v157
  %v197 = vunpack.c.l.b16 %v158
  %v198 = vunpack.c.l.b16 %v159
  %v199 = vunpack.c.l.b16 %v160
  %v200 = vunpack.c.l.b16 %v161
  %v201 = vunpack.c.l.b16 %v162
  %v202 = vunpack.c.l.b16 %v163
  %v203 = vunpack.c.l.b16 %v164
  %v204 = vunpack.c.l.b16 %v165
  %v205 = vunpack.c.l.b16 %v166
  %v206 = vunpack.c.l.b16 %v167
  %v207 = vpack.c.b16 %v192, %v191
  %v208 = vpack.c.b16 %v194, %v193
  %v209 = vpack.c.b16 %v196, %v195
  %v210 = vpack.c.b16 %v198, %v197
  %v211 = vpack.c.b16 %v200, %v199
  %v212 = vpack.c.b16 %v202, %v201
  %v213 = vpack.c.b16 %v204, %v203
  %v214 = vpack.c.b16 %v206, %v205
  %223 = vmatprep.subr.bf16.mxu0 0
  %224 = vmatpush1.bf16.msra.mxu0 %v207
  %225 = vmatprep.subr.bf16.mxu0 0
  %226 = vmatpush1.bf16.msra.mxu0 %v208
  %227 = vmatprep.subr.bf16.mxu0 0
  %228 = vmatpush1.bf16.msra.mxu0 %v209
  %229 = vmatprep.subr.bf16.mxu0 0
  %230 = vmatpush1.bf16.msra.mxu0 %v210
  %231 = vmatprep.subr.bf16.mxu0 0
  %232 = vmatpush1.bf16.msra.mxu0 %v211
  %233 = vmatprep.subr.bf16.mxu0 0
  %234 = vmatpush1.bf16.msra.mxu0 %v212
  %235 = vmatprep.subr.bf16.mxu0 0
  %236 = vmatpush1.bf16.msra.mxu0 %v213
  %237 = vmatprep.subr.bf16.mxu0 0
  %238 = vmatpush1.bf16.msra.mxu0 %v214
  %239 = vmatprep.subr.bf16.mxu0 0
  %240 = vmatpush1.bf16.msra.mxu0 0
  %241 = vmatprep.subr.bf16.mxu0 0
  %242 = vmatpush1.bf16.msra.mxu0 0
  %243 = vmatprep.subr.bf16.mxu0 0
  %244 = vmatpush1.bf16.msra.mxu0 0
  %245 = vmatprep.subr.bf16.mxu0 0
  %246 = vmatpush1.bf16.msra.mxu0 0
  %247 = vmatprep.subr.bf16.mxu0 0
  %248 = vmatpush1.bf16.msra.mxu0 0
  %249 = vmatprep.subr.bf16.mxu0 0
  %250 = vmatpush1.bf16.msra.mxu0 0
  %251 = vmatprep.subr.bf16.mxu0 0
  %252 = vmatpush1.bf16.msra.mxu0 0
  %253 = vmatprep.subr.bf16.mxu0 0
  %254 = vmatpush1.bf16.msra.mxu0 0
  %255 = vmatprep.mubr.bf16.mxu0 0
  %256 = vmatmul.mubr.bf16.gmra.mrb[0].mxu0 %v151
  %v257 = vpop.f32.mrb[0].mxu0
  %v258 = vadd.f32 %v173, %v257
  %v259 = vpop.f32.mrb[0].mxu0
  %v260 = vpop.f32.mrb[0].mxu0
  %v261 = vadd.f32 %v173, %v260
  %v262 = vpop.f32.mrb[0].mxu0
  %263 = vdwg.mxu0
  %264 = vst [vmem:[%s6] sm:$0xff] %v258
  %265 = vst [vmem:[%s6 + $0x8] sm:$0xff] %v261
  %v266 = vld [vmem:[%s5] sm:$0x1]
  %v268 = vlaneseq
  %v269 = vshrl.u32 %v268, 7
  %v270 = vsub.s32 0, %v269
  %v271 = vrot.slane %v266, %v270
  %v273 = vmul.f32 %v147, %v271
  %v274 = vmul.f32 %v148, %v271
  %v275 = vadd.f32 %v273, %v274
  %v276 = vrot.slane %v275, 4
  %v277 = vadd.f32 %v275, %v276
  %v278 = vrot.slane %v277, 2
  %v279 = vadd.f32 %v277, %v278
  %v280 = vrot.slane %v279, 1
  %v281 = vadd.f32 %v279, %v280
  %282 = vst [vmem:[%s8] sm:$0x1] %v281
  // Predicated region
  $region26: #{sae_forward_pallas.1} parent=0 // pred_check
    _
  $region27: #{sae_forward_pallas.1} parent=0 // pred_check_branch
    %284 = sbr.rel (0) target = $region29
  $region28: #{sae_forward_pallas.1} parent=0 // pred_region
    _
  $region29: #{sae_forward_pallas.1} parent=0 // pred_fallthru
    _
  // Predicated region
  $region30: #{sae_forward_pallas.1} parent=0 // pred_check
    _
  $region31: #{sae_forward_pallas.1} parent=0 // pred_check_branch
    %286 = sbr.rel (0) target = $region33
  $region32: #{sae_forward_pallas.1} parent=0 // pred_region
    _
  $region33: #{sae_forward_pallas.1} parent=0 // pred_fallthru
    _
  // Predicated region
  $region34: #{sae_forward_pallas.1} parent=0 // pred_check
    _
  $region35: #{sae_forward_pallas.1} parent=0 // pred_check_branch
    %288 = sbr.rel (0) target = $region37
  $region36: #{sae_forward_pallas.1} parent=0 // pred_region
    _
  $region37: #{sae_forward_pallas.1} parent=0 // pred_fallthru
    _
  // Predicated region
  $region38: #{sae_forward_pallas.1} parent=0 // pred_check
    _
  $region39: #{sae_forward_pallas.1} parent=0 // pred_check_branch
    %290 = sbr.rel (0) target = $region41
  $region40: #{sae_forward_pallas.1} parent=0 // pred_region
    _
  $region41: #{sae_forward_pallas.1} parent=0 // pred_fallthru
    _
  // Predicated region
  $region42: #{sae_forward_pallas.1} parent=0 // pred_check
    _
  $region43: #{sae_forward_pallas.1} parent=0 // pred_check_branch
    %292 = sbr.rel (0) target = $region45
  $region44: #{sae_forward_pallas.1} parent=0 // pred_region
    _
  $region45: #{sae_forward_pallas.1} parent=0 // pred_fallthru
    _
  // Predicated region
  $region46: #{sae_forward_pallas.1} parent=0 // pred_check
    _
  $region47: #{sae_forward_pallas.1} parent=0 // pred_check_branch
    %294 = sbr.rel (0) target = $region49
  $region48: #{sae_forward_pallas.1} parent=0 // pred_region
    _
  $region49: #{sae_forward_pallas.1} parent=0 // pred_fallthru
    _

</llo_original>
